<compile_context>
chip_gen: v6e
topology: v6e:2x2x1
jax: 0.10.0
libtpu: 0.0.40
codegen_flags: <defaults>
</compile_context>

<pallas_src>
import functools

import jax
import jax.numpy as jnp
from jax.experimental import pallas as pl
from jax.experimental.pallas import tpu as pltpu


def _round_up(a, b):
    return ((a + b - 1) // b) * b


def _xw_kernel(s_ref, x_ref, wt_ref, o_ref):
    # xw = (D~^{-1/2} x) @ W.T for one row-block of nodes, emitted as bf16.
    # s_ref: [TM, 1] f32, x_ref: [TM, C_in] f32, wt_ref: [C_in, C_pad] f32,
    # o_ref: [TM, C_pad] bf16.  Tiny (K=C_in) -> not a bottleneck; untuned.
    xw = jnp.dot(s_ref[...] * x_ref[...], wt_ref[...],
                 preferred_element_type=jnp.float32)
    o_ref[...] = xw.astype(o_ref.dtype)


def _agg_kernel(a_ref, xw_ref, s_ref, o_ref, acc_ref, *, tk, xw_resident):
    # One (row-block i, reduction-block k) step of  out = s * (A~ @ xw).
    # a_ref:   [TM, TK]                        bf16 A~ tile (streamed from HBM)
    # xw_ref:  [N_pad, C_pad] or [TK, C_pad]   bf16 transformed features
    # s_ref:   [TM, 1]                         f32  row scale (epilogue only)
    # acc_ref: [TM, C_pad]                     f32  VMEM accumulator (resident in k)
    k = pl.program_id(1)

    @pl.when(k == 0)
    def _init():
        acc_ref[...] = jnp.zeros_like(acc_ref)

    if xw_resident:
        start = pl.multiple_of(k * tk, tk)
        xw_blk = xw_ref[pl.ds(start, tk), :]
    else:
        xw_blk = xw_ref[...]

    # Native bf16 x bf16 MXU matmul, f32 accumulation.
    acc_ref[...] += jnp.dot(a_ref[...], xw_blk,
                            preferred_element_type=jnp.float32)

    @pl.when(k == pl.num_programs(1) - 1)
    def _finalize():
        o_ref[...] = s_ref[...] * acc_ref[...]


def gcn_conv(x, edge_index, W, *, tm=512, tk=2048):
    """GCNConv forward. x: [N, C_in] f32, edge_index: [2, E] int, W: [C_out, C_in]."""
    N, C_in = x.shape
    C_out = W.shape[0]
    LANE = 128

    # --- tile / padding geometry --------------------------------------------
    C_pad = _round_up(max(C_out, LANE), LANE)               # lane-dense output width
    tm = min(tm, _round_up(N, 256))                         # MXU-friendly row tile
    tk = max(tm, (min(tk, _round_up(N, tm)) // tm) * tm)    # enforce tk % tm == 0
    N_pad = _round_up(N, tk)                                # divisible by tm and tk

    src = edge_index[0]
    dst = edge_index[1]

    # --- glue (plain JAX): degree + dense normalized-adjacency inputs --------
    # TODO(synk): for large sparse graphs replace the dense O(N^2) A~ with a
    # block-sparse path (PrefetchScalarGridSpec + per-row-block lists of
    # non-empty (tm, tk) tiles) so empty tiles are never built or streamed.
    deg = jnp.zeros((N,), jnp.float32).at[src].add(1.0)            # degree()
    s = (deg + 1.0) ** (-0.5)                                      # diag(D~)^{-1/2}

    # Build A~ directly in bf16 (exact while every entry -- duplicate-edge
    # multiplicity + self-loop -- stays <= 256; heavier multigraphs would need
    # an integer build + clamp before narrowing).
    diag = jnp.arange(N)
    a_tilde = (jnp.zeros((N_pad, N_pad), jnp.bfloat16)
               .at[src, dst].add(1.0)                              # A (dupes summed)
               .at[diag, diag].add(1.0))                           # + I

    s_pad = jnp.zeros((N_pad, 1), jnp.float32).at[:N, 0].set(s)
    x_pad = jnp.zeros((N_pad, C_in), jnp.float32).at[:N, :].set(
        x.astype(jnp.float32))
    wt_pad = jnp.zeros((C_in, C_pad), jnp.float32).at[:, :C_out].set(
        W.T.astype(jnp.float32))

    # --- Pallas kernel 1: xw = (s * x) @ W.T  -> bf16 (tiny, row-tiled) -------
    xw = pl.pallas_call(
        _xw_kernel,
        out_shape=jax.ShapeDtypeStruct((N_pad, C_pad), jnp.bfloat16),
        grid=(N_pad // tm,),
        in_specs=[
            pl.BlockSpec((tm, 1), lambda i: (i, 0)),
            pl.BlockSpec((tm, C_in), lambda i: (i, 0)),
            pl.BlockSpec((C_in, C_pad), lambda i: (0, 0)),         # resident W.T
        ],
        out_specs=pl.BlockSpec((tm, C_pad), lambda i: (i, 0)),
        compiler_params=pltpu.CompilerParams(
            dimension_semantics=("parallel",)),
    )(s_pad, x_pad, wt_pad)

    # --- Pallas kernel 2: out = s * (A~ @ xw)  (tiled, pipelined) -------------
    # If the whole bf16 xw fits comfortably in VMEM, keep it resident
    # (constant index_map -> DMA'd once, never re-fetched) and slice per k-step
    # in-kernel; otherwise stream (tk, C_pad) blocks along the reduction axis.
    xw_resident = (N_pad * C_pad * 2) <= (4 << 20)
    if xw_resident:
        xw_spec = pl.BlockSpec((N_pad, C_pad), lambda i, k: (0, 0))
    else:
        xw_spec = pl.BlockSpec((tk, C_pad), lambda i, k: (k, 0))

    out_pad = pl.pallas_call(
        functools.partial(_agg_kernel, tk=tk, xw_resident=xw_resident),
        out_shape=jax.ShapeDtypeStruct((N_pad, C_pad), jnp.float32),
        grid=(N_pad // tm, N_pad // tk),
        in_specs=[
            pl.BlockSpec((tm, tk), lambda i, k: (i, k)),           # A~ (bf16 stream)
            xw_spec,                                               # xw (bf16)
            pl.BlockSpec((tm, 1), lambda i, k: (i, 0)),            # s (resident in k)
        ],
        out_specs=pl.BlockSpec((tm, C_pad), lambda i, k: (i, 0)),
        scratch_shapes=[pltpu.VMEM((tm, C_pad), jnp.float32)],
        compiler_params=pltpu.CompilerParams(
            dimension_semantics=("parallel", "arbitrary"),
            # Worst-case footprint (resident xw + A double buffer + acc/out)
            # is ~13 MiB: raise past v5e's 16 MiB default scoped limit while
            # staying well inside v7x's 64 MiB physical VMEM.
            vmem_limit_bytes=32 * 1024 * 1024),
    )(a_tilde, xw, s_pad)

    return out_pad[:N, :C_out]


def _reference(x, edge_index, W):
    N = x.shape[0]
    src, dst = edge_index[0], edge_index[1]
    deg = jnp.zeros((N,), jnp.float32).at[src].add(1.0)
    a_tilde = jnp.zeros((N, N), jnp.float32).at[src, dst].add(1.0) + jnp.eye(N)
    d_inv_sqrt = jnp.diag((deg + 1.0) ** (-0.5))
    h = d_inv_sqrt @ x
    h = a_tilde @ h
    h = d_inv_sqrt @ h
    return h @ W.T


if __name__ == "__main__":
    key = jax.random.PRNGKey(0)
    k_x, k_src, k_dst, k_w = jax.random.split(key, 4)

    N, E, C_in, C_out = 64, 256, 16, 8

    x = jax.random.normal(k_x, (N, C_in), dtype=jnp.float32)
    src = jax.random.randint(k_src, (E,), 0, N, dtype=jnp.int32)
    dst = jax.random.randint(k_dst, (E,), 0, N, dtype=jnp.int32)
    edge_index = jnp.stack([src, dst], axis=0)                      # [2, E]

    # Deterministic "Linear(in, out, bias=False)" weight: [C_out, C_in]
    W = jax.random.normal(k_w, (C_out, C_in), dtype=jnp.float32) / jnp.sqrt(C_in)

    out = gcn_conv(x, edge_index, W)
    out = jax.block_until_ready(out)

    ref = _reference(x, edge_index, W)
    assert out.shape == (N, C_out)
    # bf16 xw / bf16 MXU path (f32 accumulation): tolerance loosened vs the
    # previous all-f32 kernel.
    assert jnp.allclose(out, ref, atol=2e-2, rtol=2e-2), "mismatch vs reference"

    print("KERNEL_OK")
</pallas_src>

<mosaic_0001>
module attributes {stable_mosaic.version = 11 : i64} {
  func.func @_xw_kernel(%arg0: i32, %arg1: memref<256x1xf32, #tpu.memory_space<vmem>>, %arg2: memref<256x16xf32, #tpu.memory_space<vmem>>, %arg3: memref<16x128xf32, #tpu.memory_space<vmem>>, %arg4: memref<256x128xbf16, #tpu.memory_space<vmem>>) attributes {dimension_semantics = [#tpu.dimension_semantics<parallel>], iteration_bounds = array<i64: 1>, scalar_prefetch = 0 : i64, scratch_operands = 0 : i64, tpu.core_type = #tpu.core_type<tc>, window_params = [{transform_indices = @transform_0, window_bounds = array<i64: 256, 1>}, {transform_indices = @transform_1, window_bounds = array<i64: 256, 16>}, {pipeline_mode = #tpu.pipeline_mode<synchronous>, transform_indices = @transform_2, window_bounds = array<i64: 16, 128>}, {transform_indices = @transform_3, window_bounds = array<i64: 256, 128>}]} {
    %c0 = arith.constant 0 : index
    %c0_0 = arith.constant 0 : index
    %0 = vector.load %arg1[%c0, %c0_0] : memref<256x1xf32, #tpu.memory_space<vmem>>, vector<256x1xf32>
    %c0_1 = arith.constant 0 : index
    %c0_2 = arith.constant 0 : index
    %1 = vector.load %arg2[%c0_1, %c0_2] : memref<256x16xf32, #tpu.memory_space<vmem>>, vector<256x16xf32>
    %2 = vector.broadcast %0 : vector<256x1xf32> to vector<256x16xf32>
    %3 = arith.mulf %2, %1 : vector<256x16xf32>
    %c0_3 = arith.constant 0 : index
    %c0_4 = arith.constant 0 : index
    %4 = vector.load %arg3[%c0_3, %c0_4] : memref<16x128xf32, #tpu.memory_space<vmem>>, vector<16x128xf32>
    %cst = arith.constant dense<0.000000e+00> : vector<256x128xf32>
    %5 = tpu.matmul %3, %4, %cst {dimension_numbers = #tpu.dot_dimension_numbers<[1], [0], [0], [1], [0, 0, 1, 1], [], []>} : vector<256x16xf32>, vector<16x128xf32>, vector<256x128xf32> -> vector<256x128xf32>
    %6 = arith.truncf %5 : vector<256x128xf32> to vector<256x128xbf16>
    %c0_5 = arith.constant 0 : index
    %c0_6 = arith.constant 0 : index
    %7 = vector.load %arg4[%c0_5, %c0_6] : memref<256x128xbf16, #tpu.memory_space<vmem>>, vector<256x128xbf16>
    tpu.vector_store %arg4[%c0_5, %c0_6], %6 {strides = array<i32>} : memref<256x128xbf16, #tpu.memory_space<vmem>>, vector<256x128xbf16>,
    return
  }
  func.func @transform_0(%arg0: i32) -> (i32, i32) {
    %c0_i32 = arith.constant 0 : i32
    %c0_i32_0 = arith.constant 0 : i32
    return %arg0, %c0_i32 : i32, i32
  }
  func.func @transform_1(%arg0: i32) -> (i32, i32) {
    %c0_i32 = arith.constant 0 : i32
    %c0_i32_0 = arith.constant 0 : i32
    return %arg0, %c0_i32 : i32, i32
  }
  func.func @transform_2(%arg0: i32) -> (i32, i32) {
    %c0_i32 = arith.constant 0 : i32
    %c0_i32_0 = arith.constant 0 : i32
    %c0_i32_1 = arith.constant 0 : i32
    return %c0_i32, %c0_i32_0 : i32, i32
  }
  func.func @transform_3(%arg0: i32) -> (i32, i32) {
    %c0_i32 = arith.constant 0 : i32
    %c0_i32_0 = arith.constant 0 : i32
    return %arg0, %c0_i32 : i32, i32
  }
}

</mosaic_0001>

<llo_original>
// kernel: tpu_custom_call.1
$region0: #{tpu_custom_call.1}
  #allocation0 [shape = 'u32[]', space=smem, size = 0x4, offset = 0x4, fixed_abs, tag = 'smem constant byte address 0x4 - core index']
  #allocation1 [shape = 'u32[144,128]{1,0:T(1,128)}', space=vmem, size = 0x12000, scoped, tag = 'internal scratch']
  %s0 = inlined_call_operand.vmem [shape: f32[256,1], index: 0, kind: input, shape index: {}]
  %s1 = inlined_call_operand.vmem [shape: f32[256,16], index: 1, kind: input, shape index: {}]
  %s2 = inlined_call_operand.vmem [shape: f32[16,128], index: 2, kind: input, shape index: {}]
  %s3 = inlined_call_operand.hbm [shape: bf16[256,128], index: 3, kind: output, shape index: {}]
  %s4 = sld [smem:[#allocation0]]
  $region22: #{tpu_custom_call.1} parent=0
    _
  %s6 = ssub.s32 1, %s4
  %s7 = scalar_select 0, %s6, %s4
  $region1: #{tpu_custom_call.1} parent=0
    #allocation2 [shape = 'u8[65536]{0}', space=vmem, size = 0x10000, scoped, tag = 'output window, operand 0, single buffered']
    #allocation3 [shape = 's32[1]{0}', space=sflag, size = 0x4, scoped, tag = 'scoped memory for tpu_custom_call.1']
    %8 = vsyncpa [#allocation3], 0
    // Predicated region
    $region2: #{tpu_custom_call.1} parent=1 // pred_check
      _
    $region3: #{tpu_custom_call.1} parent=1 // pred_check_branch
      %10 = sbr.rel (0) target = $region5
    $region4: #{tpu_custom_call.1} parent=1 // pred_region
      _
    $region5: #{tpu_custom_call.1} parent=1 // pred_fallthru
      _
    // Predicated region
    $region6: #{tpu_custom_call.1} parent=1 // pred_check
      _
    $region7: #{tpu_custom_call.1} parent=1 // pred_check_branch
      %12 = sbr.rel (0) target = $region9
    $region8: #{tpu_custom_call.1} parent=1 // pred_region
      _
    $region9: #{tpu_custom_call.1} parent=1 // pred_fallthru
      _
    // Predicated region
    $region10: #{tpu_custom_call.1} parent=1 // pred_check
      _
    $region11: #{tpu_custom_call.1} parent=1 // pred_check_branch
      %14 = sbr.rel (0) target = $region13
    $region12: #{tpu_custom_call.1} parent=1 // pred_region
      _
    $region13: #{tpu_custom_call.1} parent=1 // pred_fallthru
      _
    %v15 = vld [vmem:[%s0] sm:$0xff]
    %v16 = vld [vmem:[%s0 + $0x8] sm:$0xff]
    %v17 = vld [vmem:[%s0 + $0x10] sm:$0xff]
    %v18 = vld [vmem:[%s0 + $0x18] sm:$0xff]
    %v19 = vld [vmem:[%s0 + $0x20] sm:$0xff]
    %v20 = vld [vmem:[%s0 + $0x28] sm:$0xff]
    %v21 = vld [vmem:[%s0 + $0x30] sm:$0xff]
    %v22 = vld [vmem:[%s0 + $0x38] sm:$0xff]
    %v23 = vld [vmem:[%s0 + $0x40] sm:$0xff]
    %v24 = vld [vmem:[%s0 + $0x48] sm:$0xff]
    %v25 = vld [vmem:[%s0 + $0x50] sm:$0xff]
    %v26 = vld [vmem:[%s0 + $0x58] sm:$0xff]
    %v27 = vld [vmem:[%s0 + $0x60] sm:$0xff]
    %v28 = vld [vmem:[%s0 + $0x68] sm:$0xff]
    %v29 = vld [vmem:[%s0 + $0x70] sm:$0xff]
    %v30 = vld [vmem:[%s0 + $0x78] sm:$0xff]
    %v31 = vld [vmem:[%s0 + $0x80] sm:$0xff]
    %v32 = vld [vmem:[%s0 + $0x88] sm:$0xff]
    %v33 = vld [vmem:[%s0 + $0x90] sm:$0xff]
    %v34 = vld [vmem:[%s0 + $0x98] sm:$0xff]
    %v35 = vld [vmem:[%s0 + $0xa0] sm:$0xff]
    %v36 = vld [vmem:[%s0 + $0xa8] sm:$0xff]
    %v37 = vld [vmem:[%s0 + $0xb0] sm:$0xff]
    %v38 = vld [vmem:[%s0 + $0xb8] sm:$0xff]
    %v39 = vld [vmem:[%s0 + $0xc0] sm:$0xff]
    %v40 = vld [vmem:[%s0 + $0xc8] sm:$0xff]
    %v41 = vld [vmem:[%s0 + $0xd0] sm:$0xff]
    %v42 = vld [vmem:[%s0 + $0xd8] sm:$0xff]
    %v43 = vld [vmem:[%s0 + $0xe0] sm:$0xff]
    %v44 = vld [vmem:[%s0 + $0xe8] sm:$0xff]
    %v45 = vld [vmem:[%s0 + $0xf0] sm:$0xff]
    %v46 = vld [vmem:[%s0 + $0xf8] sm:$0xff]
    %v47 = vld [vmem:[%s1] sm:$0xff]
    %v48 = vld [vmem:[%s1 + $0x8] sm:$0xff]
    %v49 = vld [vmem:[%s1 + $0x10] sm:$0xff]
    %v50 = vld [vmem:[%s1 + $0x18] sm:$0xff]
    %v51 = vld [vmem:[%s1 + $0x20] sm:$0xff]
    %v52 = vld [vmem:[%s1 + $0x28] sm:$0xff]
    %v53 = vld [vmem:[%s1 + $0x30] sm:$0xff]
    %v54 = vld [vmem:[%s1 + $0x38] sm:$0xff]
    %v55 = vld [vmem:[%s1 + $0x40] sm:$0xff]
    %v56 = vld [vmem:[%s1 + $0x48] sm:$0xff]
    %v57 = vld [vmem:[%s1 + $0x50] sm:$0xff]
    %v58 = vld [vmem:[%s1 + $0x58] sm:$0xff]
    %v59 = vld [vmem:[%s1 + $0x60] sm:$0xff]
    %v60 = vld [vmem:[%s1 + $0x68] sm:$0xff]
    %v61 = vld [vmem:[%s1 + $0x70] sm:$0xff]
    %v62 = vld [vmem:[%s1 + $0x78] sm:$0xff]
    %v63 = vld [vmem:[%s1 + $0x80] sm:$0xff]
    %v64 = vld [vmem:[%s1 + $0x88] sm:$0xff]
    %v65 = vld [vmem:[%s1 + $0x90] sm:$0xff]
    %v66 = vld [vmem:[%s1 + $0x98] sm:$0xff]
    %v67 = vld [vmem:[%s1 + $0xa0] sm:$0xff]
    %v68 = vld [vmem:[%s1 + $0xa8] sm:$0xff]
    %v69 = vld [vmem:[%s1 + $0xb0] sm:$0xff]
    %v70 = vld [vmem:[%s1 + $0xb8] sm:$0xff]
    %v71 = vld [vmem:[%s1 + $0xc0] sm:$0xff]
    %v72 = vld [vmem:[%s1 + $0xc8] sm:$0xff]
    %v73 = vld [vmem:[%s1 + $0xd0] sm:$0xff]
    %v74 = vld [vmem:[%s1 + $0xd8] sm:$0xff]
    %v75 = vld [vmem:[%s1 + $0xe0] sm:$0xff]
    %v76 = vld [vmem:[%s1 + $0xe8] sm:$0xff]
    %v77 = vld [vmem:[%s1 + $0xf0] sm:$0xff]
    %v78 = vld [vmem:[%s1 + $0xf8] sm:$0xff]
    %80 = vset.pattern.permute.xlu0 0
    %81 = vperm.xlu0 %80, %v15
    %v82 = vpop.permute.xlu0 %81
    %85 = vset.pattern.permute.xlu0 0
    %86 = vperm.xlu0 %85, %v16
    %v87 = vpop.permute.xlu0 %86
    %90 = vset.pattern.permute.xlu0 0
    %91 = vperm.xlu0 %90, %v17
    %v92 = vpop.permute.xlu0 %91
    %95 = vset.pattern.permute.xlu0 0
    %96 = vperm.xlu0 %95, %v18
    %v97 = vpop.permute.xlu0 %96
    %100 = vset.pattern.permute.xlu0 0
    %101 = vperm.xlu0 %100, %v19
    %v102 = vpop.permute.xlu0 %101
    %105 = vset.pattern.permute.xlu0 0
    %106 = vperm.xlu0 %105, %v20
    %v107 = vpop.permute.xlu0 %106
    %110 = vset.pattern.permute.xlu0 0
    %111 = vperm.xlu0 %110, %v21
    %v112 = vpop.permute.xlu0 %111
    %115 = vset.pattern.permute.xlu0 0
    %116 = vperm.xlu0 %115, %v22
    %v117 = vpop.permute.xlu0 %116
    %120 = vset.pattern.permute.xlu0 0
    %121 = vperm.xlu0 %120, %v23
    %v122 = vpop.permute.xlu0 %121
    %125 = vset.pattern.permute.xlu0 0
    %126 = vperm.xlu0 %125, %v24
    %v127 = vpop.permute.xlu0 %126
    %130 = vset.pattern.permute.xlu0 0
    %131 = vperm.xlu0 %130, %v25
    %v132 = vpop.permute.xlu0 %131
    %135 = vset.pattern.permute.xlu0 0
    %136 = vperm.xlu0 %135, %v26
    %v137 = vpop.permute.xlu0 %136
    %140 = vset.pattern.permute.xlu0 0
    %141 = vperm.xlu0 %140, %v27
    %v142 = vpop.permute.xlu0 %141
    %145 = vset.pattern.permute.xlu0 0
    %146 = vperm.xlu0 %145, %v28
    %v147 = vpop.permute.xlu0 %146
    %150 = vset.pattern.permute.xlu0 0
    %151 = vperm.xlu0 %150, %v29
    %v152 = vpop.permute.xlu0 %151
    %155 = vset.pattern.permute.xlu0 0
    %156 = vperm.xlu0 %155, %v30
    %v157 = vpop.permute.xlu0 %156
    %160 = vset.pattern.permute.xlu0 0
    %161 = vperm.xlu0 %160, %v31
    %v162 = vpop.permute.xlu0 %161
    %165 = vset.pattern.permute.xlu0 0
    %166 = vperm.xlu0 %165, %v32
    %v167 = vpop.permute.xlu0 %166
    %170 = vset.pattern.permute.xlu0 0
    %171 = vperm.xlu0 %170, %v33
    %v172 = vpop.permute.xlu0 %171
    %175 = vset.pattern.permute.xlu0 0
    %176 = vperm.xlu0 %175, %v34
    %v177 = vpop.permute.xlu0 %176
    %180 = vset.pattern.permute.xlu0 0
    %181 = vperm.xlu0 %180, %v35
    %v182 = vpop.permute.xlu0 %181
    %185 = vset.pattern.permute.xlu0 0
    %186 = vperm.xlu0 %185, %v36
    %v187 = vpop.permute.xlu0 %186
    %190 = vset.pattern.permute.xlu0 0
    %191 = vperm.xlu0 %190, %v37
    %v192 = vpop.permute.xlu0 %191
    %195 = vset.pattern.permute.xlu0 0
    %196 = vperm.xlu0 %195, %v38
    %v197 = vpop.permute.xlu0 %196
    %200 = vset.pattern.permute.xlu0 0
    %201 = vperm.xlu0 %200, %v39
    %v202 = vpop.permute.xlu0 %201
    %205 = vset.pattern.permute.xlu0 0
    %206 = vperm.xlu0 %205, %v40
    %v207 = vpop.permute.xlu0 %206
    %210 = vset.pattern.permute.xlu0 0
    %211 = vperm.xlu0 %210, %v41
    %v212 = vpop.permute.xlu0 %211
    %215 = vset.pattern.permute.xlu0 0
    %216 = vperm.xlu0 %215, %v42
    %v217 = vpop.permute.xlu0 %216
    %220 = vset.pattern.permute.xlu0 0
    %221 = vperm.xlu0 %220, %v43
    %v222 = vpop.permute.xlu0 %221
    %225 = vset.pattern.permute.xlu0 0
    %226 = vperm.xlu0 %225, %v44
    %v227 = vpop.permute.xlu0 %226
    %230 = vset.pattern.permute.xlu0 0
    %231 = vperm.xlu0 %230, %v45
    %v232 = vpop.permute.xlu0 %231
    %235 = vset.pattern.permute.xlu0 0
    %236 = vperm.xlu0 %235, %v46
    %v237 = vpop.permute.xlu0 %236
    %v239 = vmul.f32 %v82, %v47
    %v240 = vmul.f32 %v87, %v48
    %v241 = vmul.f32 %v92, %v49
    %v242 = vmul.f32 %v97, %v50
    %v243 = vmul.f32 %v102, %v51
    %v244 = vmul.f32 %v107, %v52
    %v245 = vmul.f32 %v112, %v53
    %v246 = vmul.f32 %v117, %v54
    %v247 = vmul.f32 %v122, %v55
    %v248 = vmul.f32 %v127, %v56
    %v249 = vmul.f32 %v132, %v57
    %v250 = vmul.f32 %v137, %v58
    %v251 = vmul.f32 %v142, %v59
    %v252 = vmul.f32 %v147, %v60
    %v253 = vmul.f32 %v152, %v61
    %v254 = vmul.f32 %v157, %v62
    %v255 = vmul.f32 %v162, %v63
    %v256 = vmul.f32 %v167, %v64
    %v257 = vmul.f32 %v172, %v65
    %v258 = vmul.f32 %v177, %v66
    %v259 = vmul.f32 %v182, %v67
    %v260 = vmul.f32 %v187, %v68
    %v261 = vmul.f32 %v192, %v69
    %v262 = vmul.f32 %v197, %v70
    %v263 = vmul.f32 %v202, %v71
    %v264 = vmul.f32 %v207, %v72
    %v265 = vmul.f32 %v212, %v73
    %v266 = vmul.f32 %v217, %v74
    %v267 = vmul.f32 %v222, %v75
    %v268 = vmul.f32 %v227, %v76
    %v269 = vmul.f32 %v232, %v77
    %v270 = vmul.f32 %v237, %v78
    %v271 = vld [vmem:[%s2] sm:$0xff]
    %v272 = vld [vmem:[%s2 + $0x8] sm:$0xff]
    %vm273 = vcmask 130048
    %v275 = vsel %vm273, %v239, 0
    %v278 = vsel %vm273, %v240, 0
    %v281 = vsel %vm273, %v241, 0
    %v284 = vsel %vm273, %v242, 0
    %v287 = vsel %vm273, %v243, 0
    %v290 = vsel %vm273, %v244, 0
    %v293 = vsel %vm273, %v245, 0
    %v296 = vsel %vm273, %v246, 0
    %v299 = vsel %vm273, %v247, 0
    %v302 = vsel %vm273, %v248, 0
    %v305 = vsel %vm273, %v249, 0
    %v308 = vsel %vm273, %v250, 0
    %v311 = vsel %vm273, %v251, 0
    %v314 = vsel %vm273, %v252, 0
    %v317 = vsel %vm273, %v253, 0
    %v320 = vsel %vm273, %v254, 0
    %v323 = vsel %vm273, %v255, 0
    %v326 = vsel %vm273, %v256, 0
    %v329 = vsel %vm273, %v257, 0
    %v332 = vsel %vm273, %v258, 0
    %v335 = vsel %vm273, %v259, 0
    %v338 = vsel %vm273, %v260, 0
    %v341 = vsel %vm273, %v261, 0
    %v344 = vsel %vm273, %v262, 0
    %v347 = vsel %vm273, %v263, 0
    %v350 = vsel %vm273, %v264, 0
    %v353 = vsel %vm273, %v265, 0
    %v356 = vsel %vm273, %v266, 0
    %v359 = vsel %vm273, %v267, 0
    %v362 = vsel %vm273, %v268, 0
    %v365 = vsel %vm273, %v269, 0
    %v368 = vsel %vm273, %v270, 0
    %370 = vmatprep.subr.mxu0 0.0
    %371 = vmatpush1.msra.mxu0 0.0
    %372 = vmatprep.subr.mxu0 0.0
    %373 = vmatpush1.msra.mxu0 0.0
    %374 = vmatprep.subr.mxu0 0.0
    %375 = vmatpush1.msra.mxu0 0.0
    %376 = vmatprep.subr.mxu0 0.0
    %377 = vmatpush1.msra.mxu0 0.0
    %378 = vmatprep.subr.mxu0 0.0
    %379 = vmatpush1.msra.mxu0 0.0
    %380 = vmatprep.subr.mxu0 0.0
    %381 = vmatpush1.msra.mxu0 0.0
    %382 = vmatprep.subr.mxu0 0.0
    %383 = vmatpush1.msra.mxu0 0.0
    %384 = vmatprep.subr.mxu0 0.0
    %385 = vmatpush1.msra.mxu0 0.0
    %386 = vmatprep.subr.mxu0 0.0
    %387 = vmatpush1.msra.mxu0 0.0
    %388 = vmatprep.subr.mxu0 0.0
    %389 = vmatpush1.msra.mxu0 0.0
    %390 = vmatprep.subr.mxu0 0.0
    %391 = vmatpush1.msra.mxu0 0.0
    %392 = vmatprep.subr.mxu0 0.0
    %393 = vmatpush1.msra.mxu0 0.0
    %394 = vmatprep.subr.mxu0 0.0
    %395 = vmatpush1.msra.mxu0 0.0
    %396 = vmatprep.subr.mxu0 0.0
    %397 = vmatpush1.msra.mxu0 0.0
    %398 = vmatprep.subr.mxu0 0.0
    %399 = vmatpush1.msra.mxu0 %v272
    %400 = vmatprep.subr.mxu0 0.0
    %401 = vmatpush1.msra.mxu0 %v271
    %402 = vmatprep.subr.mxu0 0.0
    %403 = vmatpush2.msra.mxu0 0.0
    %404 = vmatprep.subr.mxu0 0.0
    %405 = vmatpush2.msra.mxu0 0.0
    %406 = vmatprep.subr.mxu0 0.0
    %407 = vmatpush2.msra.mxu0 0.0
    %408 = vmatprep.subr.mxu0 0.0
    %409 = vmatpush2.msra.mxu0 0.0
    %410 = vmatprep.subr.mxu0 0.0
    %411 = vmatpush2.msra.mxu0 0.0
    %412 = vmatprep.subr.mxu0 0.0
    %413 = vmatpush2.msra.mxu0 0.0
    %414 = vmatprep.subr.mxu0 0.0
    %415 = vmatpush2.msra.mxu0 0.0
    %416 = vmatprep.subr.mxu0 0.0
    %417 = vmatpush2.msra.mxu0 0.0
    %418 = vmatprep.subr.mxu0 0.0
    %419 = vmatpush2.msra.mxu0 0.0
    %420 = vmatprep.subr.mxu0 0.0
    %421 = vmatpush2.msra.mxu0 0.0
    %422 = vmatprep.subr.mxu0 0.0
    %423 = vmatpush2.msra.mxu0 0.0
    %424 = vmatprep.subr.mxu0 0.0
    %425 = vmatpush2.msra.mxu0 0.0
    %426 = vmatprep.subr.mxu0 0.0
    %427 = vmatpush2.msra.mxu0 0.0
    %428 = vmatprep.subr.mxu0 0.0
    %429 = vmatpush2.msra.mxu0 0.0
    %430 = vmatprep.subr.mxu0 0.0
    %431 = vmatpush2.msra.mxu0 0.0
    %432 = vmatprep.subr.mxu0 0.0
    %433 = vmatpush2.msra.mxu0 0.0
    %434 = vmatprep.mubr.f32.mxu0 0.0
    %435 = vmatmul.mubr.f32.gmra.mxu0 %v275
    %v436 = vpop.f32.mrf.mxu0
    %v437 = vadd.f32 0.0, %v436
    %v438 = vpop.f32.mrf.mxu0
    %439 = vmatprep.mubr.f32.mxu0 0.0
    %440 = vmatmul.mubr.f32.gmra.mxu0 %v278
    %v441 = vpop.f32.mrf.mxu0
    %v442 = vadd.f32 0.0, %v441
    %v443 = vpop.f32.mrf.mxu0
    %444 = vmatprep.mubr.f32.mxu0 0.0
    %445 = vmatmul.mubr.f32.gmra.mxu0 %v281
    %v446 = vpop.f32.mrf.mxu0
    %v447 = vadd.f32 0.0, %v446
    %v448 = vpop.f32.mrf.mxu0
    %449 = vmatprep.mubr.f32.mxu0 0.0
    %450 = vmatmul.mubr.f32.gmra.mxu0 %v284
    %v451 = vpop.f32.mrf.mxu0
    %v452 = vadd.f32 0.0, %v451
    %v453 = vpop.f32.mrf.mxu0
    %454 = vmatprep.mubr.f32.mxu0 0.0
    %455 = vmatmul.mubr.f32.gmra.mxu0 %v287
    %v456 = vpop.f32.mrf.mxu0
    %v457 = vadd.f32 0.0, %v456
    %v458 = vpop.f32.mrf.mxu0
    %459 = vmatprep.mubr.f32.mxu0 0.0
    %460 = vmatmul.mubr.f32.gmra.mxu0 %v290
    %v461 = vpop.f32.mrf.mxu0
    %v462 = vadd.f32 0.0, %v461
    %v463 = vpop.f32.mrf.mxu0
    %464 = vmatprep.mubr.f32.mxu0 0.0
    %465 = vmatmul.mubr.f32.gmra.mxu0 %v293
    %v466 = vpop.f32.mrf.mxu0
    %v467 = vadd.f32 0.0, %v466
    %v468 = vpop.f32.mrf.mxu0
    %469 = vmatprep.mubr.f32.mxu0 0.0
    %470 = vmatmul.mubr.f32.gmra.mxu0 %v296
    %v471 = vpop.f32.mrf.mxu0
    %v472 = vadd.f32 0.0, %v471
    %v473 = vpop.f32.mrf.mxu0
    %474 = vmatprep.mubr.f32.mxu0 0.0
    %475 = vmatmul.mubr.f32.gmra.mxu0 %v299
    %v476 = vpop.f32.mrf.mxu0
    %v477 = vadd.f32 0.0, %v476
    %v478 = vpop.f32.mrf.mxu0
    %479 = vmatprep.mubr.f32.mxu0 0.0
    %480 = vmatmul.mubr.f32.gmra.mxu0 %v302
    %v481 = vpop.f32.mrf.mxu0
    %v482 = vadd.f32 0.0, %v481
    %v483 = vpop.f32.mrf.mxu0
    %484 = vmatprep.mubr.f32.mxu0 0.0
    %485 = vmatmul.mubr.f32.gmra.mxu0 %v305
    %v486 = vpop.f32.mrf.mxu0
    %v487 = vadd.f32 0.0, %v486
    %v488 = vpop.f32.mrf.mxu0
    %489 = vmatprep.mubr.f32.mxu0 0.0
    %490 = vmatmul.mubr.f32.gmra.mxu0 %v308
    %v491 = vpop.f32.mrf.mxu0
    %v492 = vadd.f32 0.0, %v491
    %v493 = vpop.f32.mrf.mxu0
    %494 = vmatprep.mubr.f32.mxu0 0.0
    %495 = vmatmul.mubr.f32.gmra.mxu0 %v311
    %v496 = vpop.f32.mrf.mxu0
    %v497 = vadd.f32 0.0, %v496
    %v498 = vpop.f32.mrf.mxu0
    %499 = vmatprep.mubr.f32.mxu0 0.0
    %500 = vmatmul.mubr.f32.gmra.mxu0 %v314
    %v501 = vpop.f32.mrf.mxu0
    %v502 = vadd.f32 0.0, %v501
    %v503 = vpop.f32.mrf.mxu0
    %504 = vmatprep.mubr.f32.mxu0 0.0
    %505 = vmatmul.mubr.f32.gmra.mxu0 %v317
    %v506 = vpop.f32.mrf.mxu0
    %v507 = vadd.f32 0.0, %v506
    %v508 = vpop.f32.mrf.mxu0
    %509 = vmatprep.mubr.f32.mxu0 0.0
    %510 = vmatmul.mubr.f32.gmra.mxu0 %v320
    %v511 = vpop.f32.mrf.mxu0
    %v512 = vadd.f32 0.0, %v511
    %v513 = vpop.f32.mrf.mxu0
    %514 = vmatprep.mubr.f32.mxu0 0.0
    %515 = vmatmul.mubr.f32.gmra.mxu0 %v323
    %v516 = vpop.f32.mrf.mxu0
    %v517 = vadd.f32 0.0, %v516
    %v518 = vpop.f32.mrf.mxu0
    %519 = vmatprep.mubr.f32.mxu0 0.0
    %520 = vmatmul.mubr.f32.gmra.mxu0 %v326
    %v521 = vpop.f32.mrf.mxu0
    %v522 = vadd.f32 0.0, %v521
    %v523 = vpop.f32.mrf.mxu0
    %524 = vmatprep.mubr.f32.mxu0 0.0
    %525 = vmatmul.mubr.f32.gmra.mxu0 %v329
    %v526 = vpop.f32.mrf.mxu0
    %v527 = vadd.f32 0.0, %v526
    %v528 = vpop.f32.mrf.mxu0
    %529 = vmatprep.mubr.f32.mxu0 0.0
    %530 = vmatmul.mubr.f32.gmra.mxu0 %v332
    %v531 = vpop.f32.mrf.mxu0
    %v532 = vadd.f32 0.0, %v531
    %v533 = vpop.f32.mrf.mxu0
    %534 = vmatprep.mubr.f32.mxu0 0.0
    %535 = vmatmul.mubr.f32.gmra.mxu0 %v335
    %v536 = vpop.f32.mrf.mxu0
    %v537 = vadd.f32 0.0, %v536
    %v538 = vpop.f32.mrf.mxu0
    %539 = vmatprep.mubr.f32.mxu0 0.0
    %540 = vmatmul.mubr.f32.gmra.mxu0 %v338
    %v541 = vpop.f32.mrf.mxu0
    %v542 = vadd.f32 0.0, %v541
    %v543 = vpop.f32.mrf.mxu0
    %544 = vmatprep.mubr.f32.mxu0 0.0
    %545 = vmatmul.mubr.f32.gmra.mxu0 %v341
    %v546 = vpop.f32.mrf.mxu0
    %v547 = vadd.f32 0.0, %v546
    %v548 = vpop.f32.mrf.mxu0
    %549 = vmatprep.mubr.f32.mxu0 0.0
    %550 = vmatmul.mubr.f32.gmra.mxu0 %v344
    %v551 = vpop.f32.mrf.mxu0
    %v552 = vadd.f32 0.0, %v551
    %v553 = vpop.f32.mrf.mxu0
    %554 = vmatprep.mubr.f32.mxu0 0.0
    %555 = vmatmul.mubr.f32.gmra.mxu0 %v347
    %v556 = vpop.f32.mrf.mxu0
    %v557 = vadd.f32 0.0, %v556
    %v558 = vpop.f32.mrf.mxu0
    %559 = vmatprep.mubr.f32.mxu0 0.0
    %560 = vmatmul.mubr.f32.gmra.mxu0 %v350
    %v561 = vpop.f32.mrf.mxu0
    %v562 = vadd.f32 0.0, %v561
    %v563 = vpop.f32.mrf.mxu0
    %564 = vmatprep.mubr.f32.mxu0 0.0
    %565 = vmatmul.mubr.f32.gmra.mxu0 %v353
    %v566 = vpop.f32.mrf.mxu0
    %v567 = vadd.f32 0.0, %v566
    %v568 = vpop.f32.mrf.mxu0
    %569 = vmatprep.mubr.f32.mxu0 0.0
    %570 = vmatmul.mubr.f32.gmra.mxu0 %v356
    %v571 = vpop.f32.mrf.mxu0
    %v572 = vadd.f32 0.0, %v571
    %v573 = vpop.f32.mrf.mxu0
    %574 = vmatprep.mubr.f32.mxu0 0.0
    %575 = vmatmul.mubr.f32.gmra.mxu0 %v359
    %v576 = vpop.f32.mrf.mxu0
    %v577 = vadd.f32 0.0, %v576
    %v578 = vpop.f32.mrf.mxu0
    %579 = vmatprep.mubr.f32.mxu0 0.0
    %580 = vmatmul.mubr.f32.gmra.mxu0 %v362
    %v581 = vpop.f32.mrf.mxu0
    %v582 = vadd.f32 0.0, %v581
    %v583 = vpop.f32.mrf.mxu0
    %584 = vmatprep.mubr.f32.mxu0 0.0
    %585 = vmatmul.mubr.f32.gmra.mxu0 %v365
    %v586 = vpop.f32.mrf.mxu0
    %v587 = vadd.f32 0.0, %v586
    %v588 = vpop.f32.mrf.mxu0
    %589 = vmatprep.mubr.f32.mxu0 0.0
    %590 = vmatmul.mubr.f32.gmra.mxu0 %v368
    %v591 = vpop.f32.mrf.mxu0
    %v592 = vadd.f32 0.0, %v591
    %v593 = vpop.f32.mrf.mxu0
    %594 = vdwg.mxu0
    %v595 = vpack.c.bf16 %v442, %v437
    %v596 = vpack.c.bf16 %v452, %v447
    %v597 = vpack.c.bf16 %v462, %v457
    %v598 = vpack.c.bf16 %v472, %v467
    %v599 = vpack.c.bf16 %v482, %v477
    %v600 = vpack.c.bf16 %v492, %v487
    %v601 = vpack.c.bf16 %v502, %v497
    %v602 = vpack.c.bf16 %v512, %v507
    %v603 = vpack.c.bf16 %v522, %v517
    %v604 = vpack.c.bf16 %v532, %v527
    %v605 = vpack.c.bf16 %v542, %v537
    %v606 = vpack.c.bf16 %v552, %v547
    %v607 = vpack.c.bf16 %v562, %v557
    %v608 = vpack.c.bf16 %v572, %v567
    %v609 = vpack.c.bf16 %v582, %v577
    %v610 = vpack.c.bf16 %v592, %v587
    %v627 = vunpack.c.l.b16 %v595
    %v628 = vunpack.c.h.b16 %v595
    %v629 = vunpack.c.l.b16 %v596
    %v630 = vunpack.c.h.b16 %v596
    %v631 = vunpack.c.l.b16 %v597
    %v632 = vunpack.c.h.b16 %v597
    %v633 = vunpack.c.l.b16 %v598
    %v634 = vunpack.c.h.b16 %v598
    %v635 = vunpack.c.l.b16 %v599
    %v636 = vunpack.c.h.b16 %v599
    %v637 = vunpack.c.l.b16 %v600
    %v638 = vunpack.c.h.b16 %v600
    %v639 = vunpack.c.l.b16 %v601
    %v640 = vunpack.c.h.b16 %v601
    %v641 = vunpack.c.l.b16 %v602
    %v642 = vunpack.c.h.b16 %v602
    %v643 = vunpack.c.l.b16 %v603
    %v644 = vunpack.c.h.b16 %v603
    %v645 = vunpack.c.l.b16 %v604
    %v646 = vunpack.c.h.b16 %v604
    %v647 = vunpack.c.l.b16 %v605
    %v648 = vunpack.c.h.b16 %v605
    %v649 = vunpack.c.l.b16 %v606
    %v650 = vunpack.c.h.b16 %v606
    %v651 = vunpack.c.l.b16 %v607
    %v652 = vunpack.c.h.b16 %v607
    %v653 = vunpack.c.l.b16 %v608
    %v654 = vunpack.c.h.b16 %v608
    %v655 = vunpack.c.l.b16 %v609
    %v656 = vunpack.c.h.b16 %v609
    %v657 = vunpack.c.l.b16 %v610
    %v658 = vunpack.c.h.b16 %v610
    %v659 = vpack.c.b16 %v627, %v627
    %v660 = vpack.c.b16 %v628, %v628
    %v661 = vpack.c.b16 %v629, %v629
    %v662 = vpack.c.b16 %v630, %v630
    %v663 = vpack.c.b16 %v631, %v631
    %v664 = vpack.c.b16 %v632, %v632
    %v665 = vpack.c.b16 %v633, %v633
    %v666 = vpack.c.b16 %v634, %v634
    %v667 = vpack.c.b16 %v635, %v635
    %v668 = vpack.c.b16 %v636, %v636
    %v669 = vpack.c.b16 %v637, %v637
    %v670 = vpack.c.b16 %v638, %v638
    %v671 = vpack.c.b16 %v639, %v639
    %v672 = vpack.c.b16 %v640, %v640
    %v673 = vpack.c.b16 %v641, %v641
    %v674 = vpack.c.b16 %v642, %v642
    %v675 = vpack.c.b16 %v643, %v643
    %v676 = vpack.c.b16 %v644, %v644
    %v677 = vpack.c.b16 %v645, %v645
    %v678 = vpack.c.b16 %v646, %v646
    %v679 = vpack.c.b16 %v647, %v647
    %v680 = vpack.c.b16 %v648, %v648
    %v681 = vpack.c.b16 %v649, %v649
    %v682 = vpack.c.b16 %v650, %v650
    %v683 = vpack.c.b16 %v651, %v651
    %v684 = vpack.c.b16 %v652, %v652
    %v685 = vpack.c.b16 %v653, %v653
    %v686 = vpack.c.b16 %v654, %v654
    %v687 = vpack.c.b16 %v655, %v655
    %v688 = vpack.c.b16 %v656, %v656
    %v689 = vpack.c.b16 %v657, %v657
    %v690 = vpack.c.b16 %v658, %v658
    %723 = vst [vmem:[#allocation2] sm:$0xf] %v659
    %724 = vst [vmem:[#allocation2 + $0x4] sm:$0xf] %v660
    %725 = vst [vmem:[#allocation2 + $0x8] sm:$0xf] %v661
    %726 = vst [vmem:[#allocation2 + $0xc] sm:$0xf] %v662
    %727 = vst [vmem:[#allocation2 + $0x10] sm:$0xf] %v663
    %728 = vst [vmem:[#allocation2 + $0x14] sm:$0xf] %v664
    %729 = vst [vmem:[#allocation2 + $0x18] sm:$0xf] %v665
    %730 = vst [vmem:[#allocation2 + $0x1c] sm:$0xf] %v666
    %731 = vst [vmem:[#allocation2 + $0x20] sm:$0xf] %v667
    %732 = vst [vmem:[#allocation2 + $0x24] sm:$0xf] %v668
    %733 = vst [vmem:[#allocation2 + $0x28] sm:$0xf] %v669
    %734 = vst [vmem:[#allocation2 + $0x2c] sm:$0xf] %v670
    %735 = vst [vmem:[#allocation2 + $0x30] sm:$0xf] %v671
    %736 = vst [vmem:[#allocation2 + $0x34] sm:$0xf] %v672
    %737 = vst [vmem:[#allocation2 + $0x38] sm:$0xf] %v673
    %738 = vst [vmem:[#allocation2 + $0x3c] sm:$0xf] %v674
    %739 = vst [vmem:[#allocation2 + $0x40] sm:$0xf] %v675
    %740 = vst [vmem:[#allocation2 + $0x44] sm:$0xf] %v676
    %741 = vst [vmem:[#allocation2 + $0x48] sm:$0xf] %v677
    %742 = vst [vmem:[#allocation2 + $0x4c] sm:$0xf] %v678
    %743 = vst [vmem:[#allocation2 + $0x50] sm:$0xf] %v679
    %744 = vst [vmem:[#allocation2 + $0x54] sm:$0xf] %v680
    %745 = vst [vmem:[#allocation2 + $0x58] sm:$0xf] %v681
    %746 = vst [vmem:[#allocation2 + $0x5c] sm:$0xf] %v682
    %747 = vst [vmem:[#allocation2 + $0x60] sm:$0xf] %v683
    %748 = vst [vmem:[#allocation2 + $0x64] sm:$0xf] %v684
    %749 = vst [vmem:[#allocation2 + $0x68] sm:$0xf] %v685
    %750 = vst [vmem:[#allocation2 + $0x6c] sm:$0xf] %v686
    %751 = vst [vmem:[#allocation2 + $0x70] sm:$0xf] %v687
    %752 = vst [vmem:[#allocation2 + $0x74] sm:$0xf] %v688
    %753 = vst [vmem:[#allocation2 + $0x78] sm:$0xf] %v689
    %754 = vst [vmem:[#allocation2 + $0x7c] sm:$0xf] %v690
    // Predicated region
    $region14: #{tpu_custom_call.1} parent=1 // pred_check
      _
    $region15: #{tpu_custom_call.1} parent=1 // pred_check_branch
      %756 = sbr.rel (0) target = $region17
    $region16: #{tpu_custom_call.1} parent=1 // pred_region
      %s758 = ssub.s32 2048, 2048
      %759 = vsyncadd [#allocation3], %s758
      %s760 = sshll.u32 [#allocation2], 4
      %s761 = int_to_ptr.vmem [resolvable:$true] %s760
      %766 = dma.vmem_to_hbm [thread:$0]  %s761, 2048, %s3, [#allocation3], 64, 64, 4
    $region17: #{tpu_custom_call.1} parent=1 // pred_fallthru
      _
    // Predicated region
    $region18: #{tpu_custom_call.1} parent=1 // pred_check
      _
    $region19: #{tpu_custom_call.1} parent=1 // pred_check_branch
      %768 = sbr.rel (0) target = $region21
    $region20: #{tpu_custom_call.1} parent=1 // pred_region
      %769 = dma.done [#allocation3], 2048
    $region21: #{tpu_custom_call.1} parent=1 // pred_fallthru
      _
    %770 = vsyncpa [#allocation3], 1

</llo_original>
